<compile_context>
chip_gen: v7x
topology: tpu7x:2x2x1
jax: 0.10.0
libtpu: 0.0.40
codegen_flags: <defaults>
</compile_context>

<pallas_src>
import functools

import jax
import jax.numpy as jnp
from jax.experimental import pallas as pl
from jax.experimental.pallas import tpu as pltpu


def _round_up(x: int, m: int) -> int:
    return (x + m - 1) // m * m


# --------------------------------------------------------------------------- #
# Kernels
# --------------------------------------------------------------------------- #
def _accum_seq(x_ref, acc_ref, s_idx, *, seq_len: int, seq_tile: int):
    """Accumulate f32 per-tile sums over the sequence axis into acc_ref."""
    last_s = pl.num_programs(1) - 1

    @pl.when(s_idx == 0)
    def _init():
        acc_ref[...] = jnp.zeros_like(acc_ref)

    def _add(x):
        # f32 accumulation (matches the fp32 PyTorch mean; also avoids bf16
        # VALU paths on v5e).
        acc_ref[...] += jnp.sum(x.astype(jnp.float32), axis=1)

    if seq_len % seq_tile != 0:
        # Only the final sequence tile has out-of-range rows: mask it there and
        # nowhere else, so the steady-state step pays no select/iota.
        @pl.when(s_idx != last_s)
        def _full():
            _add(x_ref[...])

        @pl.when(s_idx == last_s)
        def _tail():
            x = x_ref[...]
            row = jax.lax.broadcasted_iota(jnp.int32, (1, seq_tile, 1), 1)
            valid = (s_idx * seq_tile + row) < seq_len
            _add(jnp.where(valid, x, jnp.zeros_like(x)))
    else:
        _add(x_ref[...])


def _head_kernel(x_ref, w1_ref, b1_ref, w2_ref, b2_ref, o_ref, acc_ref,
                 *, seq_len: int, seq_tile: int, inv_seq: float):
    """Grid = (batch tiles, seq tiles); seq (axis 1) is the reduction axis."""
    s_idx = pl.program_id(1)
    _accum_seq(x_ref, acc_ref, s_idx, seq_len=seq_len, seq_tile=seq_tile)

    @pl.when(s_idx == pl.num_programs(1) - 1)
    def _finish():
        pooled = acc_ref[...] * inv_seq                      # mean, divisor = true S
        # dropout (eval mode) is identity.
        # TODO(synk): training-mode dropout (pltpu.prng_*) not implemented.
        # Note: the f32 mean is cast to the weight dtype for the MXU matmul.
        h = jnp.dot(pooled.astype(w1_ref.dtype), w1_ref[...],
                    preferred_element_type=jnp.float32)
        h = jnp.tanh(h + b1_ref[...].astype(jnp.float32))    # (B_t, H)
        logits = jnp.dot(h.astype(w2_ref.dtype), w2_ref[...],
                         preferred_element_type=jnp.float32)
        logits = logits + b2_ref[...].astype(jnp.float32)    # (B_t, L_pad)
        o_ref[...] = logits.astype(o_ref.dtype)


def _pool_kernel(x_ref, o_ref, acc_ref,
                 *, seq_len: int, seq_tile: int, inv_seq: float):
    """Mean-pool only (fallback path when weights cannot be VMEM-resident)."""
    s_idx = pl.program_id(1)
    _accum_seq(x_ref, acc_ref, s_idx, seq_len=seq_len, seq_tile=seq_tile)

    @pl.when(s_idx == pl.num_programs(1) - 1)
    def _finish():
        o_ref[...] = (acc_ref[...] * inv_seq).astype(o_ref.dtype)


# --------------------------------------------------------------------------- #
# Wrappers
# --------------------------------------------------------------------------- #
def _vmem_capacity_bytes() -> int:
    try:
        return int(pltpu.get_tpu_info().vmem_capacity_bytes)
    except Exception:
        return 64 << 20          # conservative default (v7x per-core VMEM)


def _seq_tile(S: int, per_buf_budget: int, B_t: int, H: int, x_size: int):
    """Largest legal sequence tile fitting one pipeline buffer."""
    max_rows = max(min(S, 8), per_buf_budget // max(1, B_t * H * x_size))
    if S <= max_rows:
        return S                 # full array dim is always a legal block
    return (max_rows // 8) * 8   # multiple of 8 (sublane rule)


def _mean_pool(hidden_states, *, B_t, grid_b, B_out, usable, vmem_cap):
    """Fallback: bandwidth-bound mean-pool in Pallas, head done by XLA."""
    B, S, H = hidden_states.shape
    x_size = jnp.dtype(hidden_states.dtype).itemsize

    acc_bytes = B_t * H * 4
    out_bytes = 2 * B_t * H * 4
    input_budget = max(usable - acc_bytes - out_bytes - (2 << 20),
                       2 * B_t * min(S, 8) * H * x_size)
    S_t = _seq_tile(S, input_budget // 2, B_t, H, x_size)
    grid_s = pl.cdiv(S, S_t)

    vmem_need = 2 * B_t * S_t * H * x_size + acc_bytes + out_bytes
    vmem_limit = int(min(max(int(vmem_need * 1.2) + (2 << 20), 16 << 20),
                         int(vmem_cap * 0.9)))

    kernel = functools.partial(_pool_kernel, seq_len=S, seq_tile=S_t,
                               inv_seq=1.0 / S)
    pooled = pl.pallas_call(
        kernel,
        out_shape=jax.ShapeDtypeStruct((B_out, H), jnp.float32),
        grid_spec=pltpu.PrefetchScalarGridSpec(
            num_scalar_prefetch=0,
            grid=(grid_b, grid_s),
            in_specs=[pl.BlockSpec((B_t, S_t, H), lambda b, s: (b, s, 0))],
            out_specs=pl.BlockSpec((B_t, H), lambda b, s: (b, 0)),
            scratch_shapes=[pltpu.VMEM((B_t, H), jnp.float32)],
        ),
        compiler_params=pltpu.CompilerParams(
            dimension_semantics=("parallel", "arbitrary"),
            vmem_limit_bytes=vmem_limit,
        ),
    )(hidden_states)
    return pooled[:B]


def t5_classification_head(hidden_states, w_dense, b_dense, w_out, b_out,
                           *, out_dtype=jnp.float32):
    """hidden_states: (B, S, H); w_dense: (H, H); b_dense: (1, H);
    w_out: (H, L); b_out: (1, L).  Weights are stored as (in, out) so both
    matmuls are lane-dense on their output dimension.  Returns (B, L) logits
    in out_dtype (f32 by default, matching a fp32 PyTorch head)."""
    B, S, H = hidden_states.shape
    L = w_out.shape[1]
    x_dtype = hidden_states.dtype
    x_size = jnp.dtype(x_dtype).itemsize
    w_size = jnp.dtype(w_dense.dtype).itemsize
    o_size = jnp.dtype(out_dtype).itemsize

    # --- batch tiling: the input is never padded or copied in HBM -----------
    B_T_MAX = 64
    if B <= B_T_MAX:
        B_t, grid_b, B_out = B, 1, B           # block == full dim: no padding
    else:
        B_t = B_T_MAX                          # multiple of 8 (output sublanes)
        grid_b = pl.cdiv(B, B_t)
        B_out = grid_b * B_t                   # only the (tiny) output is padded;
                                               # garbage tail rows are sliced off.

    # --- logits lane padding to a multiple of 128 (lane-dense stores) -------
    L_pad = _round_up(L, 128)

    # --- VMEM budget, sized per TPU generation -------------------------------
    vmem_cap = _vmem_capacity_bytes()          # 128 MiB v5e/v6e, 64 MiB v7x
    usable = int(vmem_cap * 0.85)

    w_bytes = (H * H + H + H * L_pad + L_pad) * w_size
    single_buffer_weights = 2 * w_bytes > (8 << 20)   # only bother when it matters
    w_bufs = 1 if single_buffer_weights else 2
    acc_bytes = B_t * H * 4
    out_bytes = 2 * B_t * L_pad * o_size
    resident = w_bufs * w_bytes + out_bytes + acc_bytes

    min_tile_bytes = B_t * min(S, 8) * H * x_size
    input_budget = usable - resident - (2 << 20)      # compiler-scratch headroom
    fused_head_fits = input_budget // 2 >= min_tile_bytes

    if not fused_head_fits:
        # Weights too large to stay VMEM-resident (e.g. H=4096 f32 on v7x):
        # keep the bandwidth-bound pooling in Pallas, let XLA do the tiny
        # (B, H) matmuls instead of failing to compile or spilling.
        # TODO(synk): in-kernel tiling of w_dense over its output dimension to
        # keep the head fused for very large H.
        pooled = _mean_pool(hidden_states, B_t=B_t, grid_b=grid_b, B_out=B_out,
                            usable=usable, vmem_cap=vmem_cap)
        h = jnp.tanh(pooled @ w_dense.astype(jnp.float32)
                     + b_dense.astype(jnp.float32))
        logits = h @ w_out.astype(jnp.float32) + b_out.astype(jnp.float32)
        return logits.astype(out_dtype)

    if L_pad != L:
        w_out = jnp.pad(w_out, ((0, 0), (0, L_pad - L)))
        b_out = jnp.pad(b_out, ((0, 0), (0, L_pad - L)))

    # --- sequence tile sized from the remaining VMEM ------------------------
    S_t = _seq_tile(S, input_budget // 2, B_t, H, x_size)
    grid_s = pl.cdiv(S, S_t)

    vmem_need = (2 * B_t * S_t * H * x_size + w_bufs * w_bytes
                 + out_bytes + acc_bytes)
    vmem_limit = int(min(max(int(vmem_need * 1.2) + (2 << 20), 16 << 20),
                         int(vmem_cap * 0.9)))

    cost = pl.CostEstimate(
        flops=int(B * S * H                              # pooling adds
                  + 2 * B_out * H * H                    # dense matmul
                  + 2 * B_out * H * L_pad),              # out_proj matmul
        transcendentals=int(B_out * H),                  # tanh
        bytes_accessed=int(B * S * H * x_size + w_bytes + B_out * L_pad * o_size),
    )

    def _const_spec(shape):
        # Weights/biases: constant block index -> fetched once, VMEM-resident.
        # Single-buffer them when they are large so the saved VMEM goes to S_t.
        if single_buffer_weights:
            return pl.BlockSpec(shape, lambda b, s: (0, 0),
                                pipeline_mode=pl.Buffered(1))
        return pl.BlockSpec(shape, lambda b, s: (0, 0))

    kernel = functools.partial(_head_kernel, seq_len=S, seq_tile=S_t,
                               inv_seq=1.0 / S)

    out_padded = pl.pallas_call(
        kernel,
        out_shape=jax.ShapeDtypeStruct((B_out, L_pad), out_dtype),
        grid_spec=pltpu.PrefetchScalarGridSpec(
            num_scalar_prefetch=0,
            grid=(grid_b, grid_s),
            in_specs=[
                # streamed input tiles (double-buffered against the reduction)
                pl.BlockSpec((B_t, S_t, H), lambda b, s: (b, s, 0)),
                _const_spec((H, H)),
                _const_spec((1, H)),
                _const_spec((H, L_pad)),
                _const_spec((1, L_pad)),
            ],
            out_specs=pl.BlockSpec((B_t, L_pad), lambda b, s: (b, 0)),
            scratch_shapes=[pltpu.VMEM((B_t, H), jnp.float32)],
        ),
        compiler_params=pltpu.CompilerParams(
            # TODO(synk): when grid_b == 1 on v7x, split the sequence reduction
            # across a leading parallel axis (per-core partial sums + combine)
            # so the second TensorCore isn't idle for small-batch inference.
            dimension_semantics=("parallel", "arbitrary"),
            vmem_limit_bytes=vmem_limit,
        ),
        cost_estimate=cost,
    )(hidden_states, w_dense, b_dense, w_out, b_out)

    return out_padded[:B, :L]


if __name__ == "__main__":
    # Small, module-consistent shapes: batch=2, seq=8, hidden=32, num_labels=4
    B, S, H, L = 2, 8, 32, 4

    key = jax.random.PRNGKey(0)
    kx, kw1, kb1, kw2, kb2 = jax.random.split(key, 5)

    hidden_states = jax.random.normal(kx, (B, S, H), dtype=jnp.float32)

    # PyTorch Linear: y = x @ W^T + b; weights stored pre-transposed (in, out).
    w_dense = jax.random.normal(kw1, (H, H), dtype=jnp.float32) * 0.05
    b_dense = jax.random.normal(kb1, (1, H), dtype=jnp.float32) * 0.05
    w_out   = jax.random.normal(kw2, (H, L), dtype=jnp.float32) * 0.05
    b_out   = jax.random.normal(kb2, (1, L), dtype=jnp.float32) * 0.05

    logits = t5_classification_head(hidden_states, w_dense, b_dense, w_out, b_out)
    logits = jax.block_until_ready(logits)

    # Pure-JAX reference (eval-mode dropout = identity)
    pooled_ref = jnp.mean(hidden_states, axis=1)
    h_ref = jnp.tanh(pooled_ref @ w_dense + b_dense)
    logits_ref = h_ref @ w_out + b_out

    assert logits.shape == (B, L)
    assert jnp.allclose(logits, logits_ref, atol=1e-4, rtol=1e-4)

    print("KERNEL_OK")
</pallas_src>

<mosaic_0001>
module attributes {stable_mosaic.version = 11 : i64} {
  func.func @_head_kernel(%arg0: i32, %arg1: i32, %arg2: memref<2x8x32xf32, #tpu.memory_space<vmem>>, %arg3: memref<32x32xf32, #tpu.memory_space<vmem>>, %arg4: memref<1x32xf32, #tpu.memory_space<vmem>>, %arg5: memref<32x128xf32, #tpu.memory_space<vmem>>, %arg6: memref<1x128xf32, #tpu.memory_space<vmem>>, %arg7: memref<2x128xf32, #tpu.memory_space<vmem>>, %arg8: memref<2x32xf32, #tpu.memory_space<vmem>>) attributes {dimension_semantics = [#tpu.dimension_semantics<parallel>, #tpu.dimension_semantics<arbitrary>], iteration_bounds = array<i64: 1, 1>, scalar_prefetch = 0 : i64, scratch_operands = 1 : i64, tpu.core_type = #tpu.core_type<tc>, window_params = [{transform_indices = @transform_0, window_bounds = array<i64: 2, 8, 32>}, {pipeline_mode = #tpu.pipeline_mode<synchronous>, transform_indices = @transform_1, window_bounds = array<i64: 32, 32>}, {pipeline_mode = #tpu.pipeline_mode<synchronous>, transform_indices = @transform_2, window_bounds = array<i64: 1, 32>}, {pipeline_mode = #tpu.pipeline_mode<synchronous>, transform_indices = @transform_3, window_bounds = array<i64: 32, 128>}, {pipeline_mode = #tpu.pipeline_mode<synchronous>, transform_indices = @transform_4, window_bounds = array<i64: 1, 128>}, {transform_indices = @transform_5, window_bounds = array<i64: 2, 128>}]} {
    %c0_i32 = arith.constant 0 : i32
    %0 = arith.cmpi eq, %arg1, %c0_i32 : i32
    %1 = arith.extui %0 : i1 to i32
    %c0_i32_0 = arith.constant 0 : i32
    %2 = arith.cmpi ne, %1, %c0_i32_0 : i32
    scf.if %2 {
      %cst_9 = arith.constant 0.000000e+00 : f32
      %11 = vector.broadcast %cst_9 : f32 to vector<2x32xf32>
      %c0_10 = arith.constant 0 : index
      %c0_11 = arith.constant 0 : index
      %12 = vector.load %arg8[%c0_10, %c0_11] : memref<2x32xf32, #tpu.memory_space<vmem>>, vector<2x32xf32>
      tpu.vector_store %arg8[%c0_10, %c0_11], %11 {strides = array<i32>} : memref<2x32xf32, #tpu.memory_space<vmem>>, vector<2x32xf32>,
    } else {
    }
    %c0 = arith.constant 0 : index
    %c0_1 = arith.constant 0 : index
    %c0_2 = arith.constant 0 : index
    %3 = vector.load %arg2[%c0, %c0_1, %c0_2] : memref<2x8x32xf32, #tpu.memory_space<vmem>>, vector<2x8x32xf32>
    %c0_3 = arith.constant 0 : index
    %c0_4 = arith.constant 0 : index
    %4 = vector.load %arg8[%c0_3, %c0_4] : memref<2x32xf32, #tpu.memory_space<vmem>>, vector<2x32xf32>
    %cst = arith.constant dense<0.000000e+00> : vector<2x32xf32>
    %5 = vector.multi_reduction <add>, %3, %cst [1] : vector<2x8x32xf32> to vector<2x32xf32>
    %6 = arith.addf %4, %5 : vector<2x32xf32>
    %c0_5 = arith.constant 0 : index
    %c0_6 = arith.constant 0 : index
    %7 = vector.load %arg8[%c0_5, %c0_6] : memref<2x32xf32, #tpu.memory_space<vmem>>, vector<2x32xf32>
    tpu.vector_store %arg8[%c0_5, %c0_6], %6 {strides = array<i32>} : memref<2x32xf32, #tpu.memory_space<vmem>>, vector<2x32xf32>,
    %c0_i32_7 = arith.constant 0 : i32
    %8 = arith.cmpi eq, %arg1, %c0_i32_7 : i32
    %9 = arith.extui %8 : i1 to i32
    %c0_i32_8 = arith.constant 0 : i32
    %10 = arith.cmpi ne, %9, %c0_i32_8 : i32
    scf.if %10 {
      %c0_9 = arith.constant 0 : index
      %c0_10 = arith.constant 0 : index
      %11 = vector.load %arg8[%c0_9, %c0_10] : memref<2x32xf32, #tpu.memory_space<vmem>>, vector<2x32xf32>
      %cst_11 = arith.constant 1.250000e-01 : f32
      %12 = vector.broadcast %cst_11 : f32 to vector<2x32xf32>
      %13 = arith.mulf %11, %12 : vector<2x32xf32>
      %c0_12 = arith.constant 0 : index
      %c0_13 = arith.constant 0 : index
      %14 = vector.load %arg3[%c0_12, %c0_13] : memref<32x32xf32, #tpu.memory_space<vmem>>, vector<32x32xf32>
      %cst_14 = arith.constant dense<0.000000e+00> : vector<2x32xf32>
      %15 = tpu.matmul %13, %14, %cst_14 {dimension_numbers = #tpu.dot_dimension_numbers<[1], [0], [0], [1], [0, 0, 1, 1], [], []>} : vector<2x32xf32>, vector<32x32xf32>, vector<2x32xf32> -> vector<2x32xf32>
      %c0_15 = arith.constant 0 : index
      %c0_16 = arith.constant 0 : index
      %16 = vector.load %arg4[%c0_15, %c0_16] : memref<1x32xf32, #tpu.memory_space<vmem>>, vector<1x32xf32>
      %17 = vector.broadcast %16 : vector<1x32xf32> to vector<2x32xf32>
      %18 = arith.addf %15, %17 : vector<2x32xf32>
      %19 = math.tanh %18 : vector<2x32xf32>
      %c0_17 = arith.constant 0 : index
      %c0_18 = arith.constant 0 : index
      %20 = vector.load %arg5[%c0_17, %c0_18] : memref<32x128xf32, #tpu.memory_space<vmem>>, vector<32x128xf32>
      %cst_19 = arith.constant dense<0.000000e+00> : vector<2x128xf32>
      %21 = tpu.matmul %19, %20, %cst_19 {dimension_numbers = #tpu.dot_dimension_numbers<[1], [0], [0], [1], [0, 0, 1, 1], [], []>} : vector<2x32xf32>, vector<32x128xf32>, vector<2x128xf32> -> vector<2x128xf32>
      %c0_20 = arith.constant 0 : index
      %c0_21 = arith.constant 0 : index
      %22 = vector.load %arg6[%c0_20, %c0_21] : memref<1x128xf32, #tpu.memory_space<vmem>>, vector<1x128xf32>
      %23 = vector.broadcast %22 : vector<1x128xf32> to vector<2x128xf32>
      %24 = arith.addf %21, %23 : vector<2x128xf32>
      %c0_22 = arith.constant 0 : index
      %c0_23 = arith.constant 0 : index
      %25 = vector.load %arg7[%c0_22, %c0_23] : memref<2x128xf32, #tpu.memory_space<vmem>>, vector<2x128xf32>
      tpu.vector_store %arg7[%c0_22, %c0_23], %24 {strides = array<i32>} : memref<2x128xf32, #tpu.memory_space<vmem>>, vector<2x128xf32>,
    } else {
    }
    return
  }
  func.func @transform_0(%arg0: i32, %arg1: i32) -> (i32, i32, i32) {
    %c0_i32 = arith.constant 0 : i32
    %c0_i32_0 = arith.constant 0 : i32
    return %arg0, %arg1, %c0_i32 : i32, i32, i32
  }
  func.func @transform_1(%arg0: i32, %arg1: i32) -> (i32, i32) {
    %c0_i32 = arith.constant 0 : i32
    %c0_i32_0 = arith.constant 0 : i32
    %c0_i32_1 = arith.constant 0 : i32
    return %c0_i32, %c0_i32_0 : i32, i32
  }
  func.func @transform_2(%arg0: i32, %arg1: i32) -> (i32, i32) {
    %c0_i32 = arith.constant 0 : i32
    %c0_i32_0 = arith.constant 0 : i32
    %c0_i32_1 = arith.constant 0 : i32
    return %c0_i32, %c0_i32_0 : i32, i32
  }
  func.func @transform_3(%arg0: i32, %arg1: i32) -> (i32, i32) {
    %c0_i32 = arith.constant 0 : i32
    %c0_i32_0 = arith.constant 0 : i32
    %c0_i32_1 = arith.constant 0 : i32
    return %c0_i32, %c0_i32_0 : i32, i32
  }
  func.func @transform_4(%arg0: i32, %arg1: i32) -> (i32, i32) {
    %c0_i32 = arith.constant 0 : i32
    %c0_i32_0 = arith.constant 0 : i32
    %c0_i32_1 = arith.constant 0 : i32
    return %c0_i32, %c0_i32_0 : i32, i32
  }
  func.func @transform_5(%arg0: i32, %arg1: i32) -> (i32, i32) {
    %c0_i32 = arith.constant 0 : i32
    %c0_i32_0 = arith.constant 0 : i32
    return %arg0, %c0_i32 : i32, i32
  }
}

</mosaic_0001>

<llo_original>
// kernel: tpu_custom_call.1
$region0: #{tpu_custom_call.1}
  #allocation0 [shape = 'u32[]', space=smem, size = 0x4, offset = 0x4, fixed_abs, tag = 'smem constant byte address 0x4 - core index']
  #allocation1 [shape = 'u32[144,128]{1,0:T(1,128)}', space=vmem, size = 0x12000, scoped, tag = 'internal scratch']
  #allocation2 [shape = 'f32[2,32]{1,0:T(2,128)}', space=vmem, size = 0x400, scoped, tag = 'scratch operand']
  %s0 = inlined_call_operand.hbm [shape: f32[2,8,32], index: 0, kind: input, shape index: {}]
  %s1 = inlined_call_operand.hbm [shape: f32[32,32], index: 1, kind: input, shape index: {}]
  %s2 = inlined_call_operand.vmem [shape: f32[1,32], index: 2, kind: input, shape index: {}]
  %s3 = inlined_call_operand.hbm [shape: f32[32,128], index: 3, kind: input, shape index: {}]
  %s4 = inlined_call_operand.vmem [shape: f32[1,128], index: 4, kind: input, shape index: {}]
  %s5 = inlined_call_operand.hbm [shape: f32[2,128], index: 5, kind: output, shape index: {}]
  %s6 = sld [smem:[#allocation0]]
  $region50: #{tpu_custom_call.1} parent=0
    _
  %s8 = ssub.s32 1, %s6
  %s9 = scalar_select 0, %s8, %s6
  $region1: #{tpu_custom_call.1} parent=0
    #allocation3 [shape = 'u8[8192]{0}', space=vmem, size = 0x2000, scoped, tag = 'input window, operand 0, single buffered']
    #allocation4 [shape = 's32[1]{0}', space=sflag, size = 0x4, scoped, tag = 'scoped memory for tpu_custom_call.1']
    #allocation5 [shape = 's32[1]{0}', space=sflag, size = 0x4, scoped, tag = 'scoped memory for tpu_custom_call.1']
    #allocation6 [shape = 'u8[16384]{0}', space=vmem, size = 0x4000, scoped, tag = 'input window, operand 1, single buffered']
    #allocation7 [shape = 's32[1]{0}', space=sflag, size = 0x4, scoped, tag = 'scoped memory for tpu_custom_call.1']
    #allocation8 [shape = 'u8[16384]{0}', space=vmem, size = 0x4000, scoped, tag = 'input window, operand 3, single buffered']
    #allocation9 [shape = 'u8[1024]{0}', space=vmem, size = 0x400, scoped, tag = 'output window, operand 0, single buffered']
    %10 = vsyncpa [#allocation4], 0
    %11 = vsyncpa [#allocation7], 0
    %12 = vsyncpa [#allocation5], 0
    // Predicated region
    $region2: #{tpu_custom_call.1} parent=1 // pred_check
      _
    $region3: #{tpu_custom_call.1} parent=1 // pred_check_branch
      %14 = sbr.rel (0) target = $region5
    $region4: #{tpu_custom_call.1} parent=1 // pred_region
      %s16 = ssub.s32 256, 256
      %17 = vsyncadd [#allocation4], %s16
      %s18 = sshll.u32 [#allocation3], 4
      %s19 = int_to_ptr.vmem [resolvable:$true] %s18
      %24 = dma.hbm_to_vmem [thread:$0]  %s0, 256, %s19, [#allocation4], 128, 128, 8
    $region5: #{tpu_custom_call.1} parent=1 // pred_fallthru
      _
    // Predicated region
    $region6: #{tpu_custom_call.1} parent=1 // pred_check
      _
    $region7: #{tpu_custom_call.1} parent=1 // pred_check_branch
      %26 = sbr.rel (0) target = $region9
    $region8: #{tpu_custom_call.1} parent=1 // pred_region
      %s28 = ssub.s32 512, 512
      %29 = vsyncadd [#allocation7], %s28
      %s30 = sshll.u32 [#allocation6], 4
      %s31 = int_to_ptr.vmem [resolvable:$true] %s30
      %36 = dma.hbm_to_vmem [thread:$0]  %s1, 512, %s31, [#allocation7], 128, 128, 8
    $region9: #{tpu_custom_call.1} parent=1 // pred_fallthru
      _
    // Predicated region
    $region10: #{tpu_custom_call.1} parent=1 // pred_check
      _
    $region11: #{tpu_custom_call.1} parent=1 // pred_check_branch
      %38 = sbr.rel (0) target = $region13
    $region12: #{tpu_custom_call.1} parent=1 // pred_region
      _
    $region13: #{tpu_custom_call.1} parent=1 // pred_fallthru
      _
    // Predicated region
    $region14: #{tpu_custom_call.1} parent=1 // pred_check
      _
    $region15: #{tpu_custom_call.1} parent=1 // pred_check_branch
      %40 = sbr.rel (0) target = $region17
    $region16: #{tpu_custom_call.1} parent=1 // pred_region
      %s42 = ssub.s32 512, 512
      %43 = vsyncadd [#allocation7], %s42
      %s44 = sshll.u32 [#allocation8], 4
      %s45 = int_to_ptr.vmem [resolvable:$true] %s44
      %50 = dma.hbm_to_vmem [thread:$0]  %s3, 512, %s45, [#allocation7], 128, 128, 8
    $region17: #{tpu_custom_call.1} parent=1 // pred_fallthru
      _
    // Predicated region
    $region18: #{tpu_custom_call.1} parent=1 // pred_check
      _
    $region19: #{tpu_custom_call.1} parent=1 // pred_check_branch
      %52 = sbr.rel (0) target = $region21
    $region20: #{tpu_custom_call.1} parent=1 // pred_region
      _
    $region21: #{tpu_custom_call.1} parent=1 // pred_fallthru
      _
    // Predicated region
    $region22: #{tpu_custom_call.1} parent=1 // pred_check
      _
    $region23: #{tpu_custom_call.1} parent=1 // pred_check_branch
      %54 = sbr.rel (0) target = $region25
    $region24: #{tpu_custom_call.1} parent=1 // pred_region
      %55 = dma.done [#allocation4], 256
    $region25: #{tpu_custom_call.1} parent=1 // pred_fallthru
      _
    // Predicated region
    $region26: #{tpu_custom_call.1} parent=1 // pred_check
      _
    $region27: #{tpu_custom_call.1} parent=1 // pred_check_branch
      %57 = sbr.rel (0) target = $region29
    $region28: #{tpu_custom_call.1} parent=1 // pred_region
      %58 = dma.done [#allocation7], 512
    $region29: #{tpu_custom_call.1} parent=1 // pred_fallthru
      _
    // Predicated region
    $region30: #{tpu_custom_call.1} parent=1 // pred_check
      _
    $region31: #{tpu_custom_call.1} parent=1 // pred_check_branch
      %60 = sbr.rel (0) target = $region33
    $region32: #{tpu_custom_call.1} parent=1 // pred_region
      %61 = dma.done [#allocation7], 512
    $region33: #{tpu_custom_call.1} parent=1 // pred_fallthru
      _
    %p62 = scmp.eq.s32.totalorder 0, 0
    // Predicated region
    $region34: #{tpu_custom_call.1} parent=1 // pred_check
      %p63 = pneg %p62
    $region35: #{tpu_custom_call.1} parent=1 // pred_check_branch
      %65 = sbr.rel (%p63) target = $region37
    $region36: #{tpu_custom_call.1} parent=1 // pred_region
      %vm66 = vcmask 254976
      %67 = vst.msk [vmem:[#allocation2] sm:$0x3] %vm66, 0.0
    $region37: #{tpu_custom_call.1} parent=1 // pred_fallthru
      _
    %v68 = vld [vmem:[#allocation3] sm:$0xff]
    %v69 = vld [vmem:[#allocation3 + $0x8] sm:$0xff]
    %v70 = vld [vmem:[#allocation2] sm:$0x3]
    %vm71 = vcmask 261120
    %v72 = vsel %vm71, %v68, 0.0
    %v73 = vrot.slane %v72, 4
    %v74 = vadd.f32 %v72, %v73
    %v75 = vrot.slane %v74, 2
    %v76 = vadd.f32 %v74, %v75
    %v77 = vrot.slane %v76, 1
    %v78 = vadd.f32 %v76, %v77
    %v79 = vsel %vm71, %v69, 0.0
    %v80 = vrot.slane %v79, 4
    %v81 = vadd.f32 %v79, %v80
    %v82 = vrot.slane %v81, 2
    %v83 = vadd.f32 %v81, %v82
    %v84 = vrot.slane %v83, 1
    %v85 = vadd.f32 %v83, %v84
    %vm88 = vcmask 1041409
    %v89 = vsel %vm88, %v85, %v78
    %v91 = vadd.f32 %v70, %v89
    %vm92 = vcmask 254976
    %93 = vst.msk [vmem:[#allocation2] sm:$0x3] %vm92, %v91
    // Predicated region
    $region38: #{tpu_custom_call.1} parent=1 // pred_check
      %p94 = pneg %p62
    $region39: #{tpu_custom_call.1} parent=1 // pred_check_branch
      %96 = sbr.rel (%p94) target = $region41
    $region40: #{tpu_custom_call.1} parent=1 // pred_region
      %v97 = vld [vmem:[#allocation2] sm:$0x3]
      %v98 = vmul.f32 %v97, 0.125
      %v99 = vld [vmem:[#allocation6] sm:$0xff]
      %v100 = vld [vmem:[#allocation6 + $0x8] sm:$0xff]
      %v101 = vld [vmem:[#allocation6 + $0x10] sm:$0xff]
      %v102 = vld [vmem:[#allocation6 + $0x18] sm:$0xff]
      %v103 = vld [vmem:[%s2] sm:$0x1]
      %v105 = vlaneseq
      %v106 = vshrl.u32 %v105, 7
      %v107 = vsub.s32 0, %v106
      %v108 = vrot.slane %v103, %v107
      %v111 = vsel %vm71, %v98, 0
      %113 = vmatprep.subr.mxu0 0.0
      %114 = vmatpush1.msra.mxu0 %v99
      %115 = vmatprep.subr.mxu0 0.0
      %116 = vmatpush1.msra.mxu0 %v100
      %117 = vmatprep.subr.mxu0 0.0
      %118 = vmatpush1.msra.mxu0 %v101
      %119 = vmatprep.subr.mxu0 0.0
      %120 = vmatpush1.msra.mxu0 %v102
      %121 = vmatprep.subr.mxu0 0.0
      %122 = vmatpush1.msra.mxu0 0.0
      %123 = vmatprep.subr.mxu0 0.0
      %124 = vmatpush1.msra.mxu0 0.0
      %125 = vmatprep.subr.mxu0 0.0
      %126 = vmatpush1.msra.mxu0 0.0
      %127 = vmatprep.subr.mxu0 0.0
      %128 = vmatpush1.msra.mxu0 0.0
      %129 = vmatprep.subr.mxu0 0.0
      %130 = vmatpush1.msra.mxu0 0.0
      %131 = vmatprep.subr.mxu0 0.0
      %132 = vmatpush1.msra.mxu0 0.0
      %133 = vmatprep.subr.mxu0 0.0
      %134 = vmatpush1.msra.mxu0 0.0
      %135 = vmatprep.subr.mxu0 0.0
      %136 = vmatpush1.msra.mxu0 0.0
      %137 = vmatprep.subr.mxu0 0.0
      %138 = vmatpush1.msra.mxu0 0.0
      %139 = vmatprep.subr.mxu0 0.0
      %140 = vmatpush1.msra.mxu0 0.0
      %141 = vmatprep.subr.mxu0 0.0
      %142 = vmatpush1.msra.mxu0 0.0
      %143 = vmatprep.subr.mxu0 0.0
      %144 = vmatpush1.msra.mxu0 0.0
      %145 = vmatprep.subr.mxu0 0.0
      %146 = vmatpush1.msra.mxu0 0.0
      %147 = vmatprep.subr.mxu0 0.0
      %148 = vmatpush1.msra.mxu0 0.0
      %149 = vmatprep.subr.mxu0 0.0
      %150 = vmatpush1.msra.mxu0 0.0
      %151 = vmatprep.subr.mxu0 0.0
      %152 = vmatpush1.msra.mxu0 0.0
      %153 = vmatprep.subr.mxu0 0.0
      %154 = vmatpush1.msra.mxu0 0.0
      %155 = vmatprep.subr.mxu0 0.0
      %156 = vmatpush1.msra.mxu0 0.0
      %157 = vmatprep.subr.mxu0 0.0
      %158 = vmatpush1.msra.mxu0 0.0
      %159 = vmatprep.subr.mxu0 0.0
      %160 = vmatpush1.msra.mxu0 0.0
      %161 = vmatprep.subr.mxu0 0.0
      %162 = vmatpush1.msra.mxu0 0.0
      %163 = vmatprep.subr.mxu0 0.0
      %164 = vmatpush1.msra.mxu0 0.0
      %165 = vmatprep.subr.mxu0 0.0
      %166 = vmatpush1.msra.mxu0 0.0
      %167 = vmatprep.subr.mxu0 0.0
      %168 = vmatpush1.msra.mxu0 0.0
      %169 = vmatprep.subr.mxu0 0.0
      %170 = vmatpush1.msra.mxu0 0.0
      %171 = vmatprep.subr.mxu0 0.0
      %172 = vmatpush1.msra.mxu0 0.0
      %173 = vmatprep.subr.mxu0 0.0
      %174 = vmatpush1.msra.mxu0 0.0
      %175 = vmatprep.subr.mxu0 0.0
      %176 = vmatpush1.msra.mxu0 0.0
      %177 = vmatprep.mubr.f32.mxu0 0.0
      %178 = vmatmul.mubr.f32.gmra.mrb[0].mxu0 %v111
      %v179 = vpop.f32.mrb[0].mxu0
      %v180 = vadd.f32 %v108, %v179
      %v181 = vpop.f32.mrb[0].mxu0
      %182 = vdwg.mxu0
      %v183 = vtanh.pop %v180
      %v184 = vld [vmem:[#allocation8] sm:$0xff]
      %v185 = vld [vmem:[#allocation8 + $0x8] sm:$0xff]
      %v186 = vld [vmem:[#allocation8 + $0x10] sm:$0xff]
      %v187 = vld [vmem:[#allocation8 + $0x18] sm:$0xff]
      %v188 = vld [vmem:[%s4] sm:$0x1]
      %v190 = vlaneseq
      %v191 = vshrl.u32 %v190, 7
      %v192 = vsub.s32 0, %v191
      %v193 = vrot.slane %v188, %v192
      %v196 = vsel %vm71, %v183, 0
      %198 = vmatprep.subr.mxu0 0.0
      %199 = vmatpush1.msra.mxu0 %v184
      %200 = vmatprep.subr.mxu0 0.0
      %201 = vmatpush1.msra.mxu0 %v185
      %202 = vmatprep.subr.mxu0 0.0
      %203 = vmatpush1.msra.mxu0 %v186
      %204 = vmatprep.subr.mxu0 0.0
      %205 = vmatpush1.msra.mxu0 %v187
      %206 = vmatprep.subr.mxu0 0.0
      %207 = vmatpush1.msra.mxu0 0.0
      %208 = vmatprep.subr.mxu0 0.0
      %209 = vmatpush1.msra.mxu0 0.0
      %210 = vmatprep.subr.mxu0 0.0
      %211 = vmatpush1.msra.mxu0 0.0
      %212 = vmatprep.subr.mxu0 0.0
      %213 = vmatpush1.msra.mxu0 0.0
      %214 = vmatprep.subr.mxu0 0.0
      %215 = vmatpush1.msra.mxu0 0.0
      %216 = vmatprep.subr.mxu0 0.0
      %217 = vmatpush1.msra.mxu0 0.0
      %218 = vmatprep.subr.mxu0 0.0
      %219 = vmatpush1.msra.mxu0 0.0
      %220 = vmatprep.subr.mxu0 0.0
      %221 = vmatpush1.msra.mxu0 0.0
      %222 = vmatprep.subr.mxu0 0.0
      %223 = vmatpush1.msra.mxu0 0.0
      %224 = vmatprep.subr.mxu0 0.0
      %225 = vmatpush1.msra.mxu0 0.0
      %226 = vmatprep.subr.mxu0 0.0
      %227 = vmatpush1.msra.mxu0 0.0
      %228 = vmatprep.subr.mxu0 0.0
      %229 = vmatpush1.msra.mxu0 0.0
      %230 = vmatprep.subr.mxu0 0.0
      %231 = vmatpush1.msra.mxu0 0.0
      %232 = vmatprep.subr.mxu0 0.0
      %233 = vmatpush1.msra.mxu0 0.0
      %234 = vmatprep.subr.mxu0 0.0
      %235 = vmatpush1.msra.mxu0 0.0
      %236 = vmatprep.subr.mxu0 0.0
      %237 = vmatpush1.msra.mxu0 0.0
      %238 = vmatprep.subr.mxu0 0.0
      %239 = vmatpush1.msra.mxu0 0.0
      %240 = vmatprep.subr.mxu0 0.0
      %241 = vmatpush1.msra.mxu0 0.0
      %242 = vmatprep.subr.mxu0 0.0
      %243 = vmatpush1.msra.mxu0 0.0
      %244 = vmatprep.subr.mxu0 0.0
      %245 = vmatpush1.msra.mxu0 0.0
      %246 = vmatprep.subr.mxu0 0.0
      %247 = vmatpush1.msra.mxu0 0.0
      %248 = vmatprep.subr.mxu0 0.0
      %249 = vmatpush1.msra.mxu0 0.0
      %250 = vmatprep.subr.mxu0 0.0
      %251 = vmatpush1.msra.mxu0 0.0
      %252 = vmatprep.subr.mxu0 0.0
      %253 = vmatpush1.msra.mxu0 0.0
      %254 = vmatprep.subr.mxu0 0.0
      %255 = vmatpush1.msra.mxu0 0.0
      %256 = vmatprep.subr.mxu0 0.0
      %257 = vmatpush1.msra.mxu0 0.0
      %258 = vmatprep.subr.mxu0 0.0
      %259 = vmatpush1.msra.mxu0 0.0
      %260 = vmatprep.subr.mxu0 0.0
      %261 = vmatpush1.msra.mxu0 0.0
      %262 = vmatprep.mubr.f32.mxu0 0.0
      %263 = vmatmul.mubr.f32.gmra.mrb[0].mxu0 %v196
      %v264 = vpop.f32.mrb[0].mxu0
      %v265 = vadd.f32 %v193, %v264
      %v266 = vpop.f32.mrb[0].mxu0
      %267 = vdwg.mxu0
      %268 = vst [vmem:[#allocation9] sm:$0x3] %v265
    $region41: #{tpu_custom_call.1} parent=1 // pred_fallthru
      _
    // Predicated region
    $region42: #{tpu_custom_call.1} parent=1 // pred_check
      _
    $region43: #{tpu_custom_call.1} parent=1 // pred_check_branch
      %270 = sbr.rel (0) target = $region45
    $region44: #{tpu_custom_call.1} parent=1 // pred_region
      %s272 = ssub.s32 32, 32
      %273 = vsyncadd [#allocation5], %s272
      %s275 = sshll.u32 [#allocation9], 4
      %s276 = int_to_ptr.vmem [resolvable:$true] %s275
      %278 = dma.vmem_to_hbm [thread:$0]  %s276, 32, %s5, [#allocation5]
    $region45: #{tpu_custom_call.1} parent=1 // pred_fallthru
      _
    // Predicated region
    $region46: #{tpu_custom_call.1} parent=1 // pred_check
      _
    $region47: #{tpu_custom_call.1} parent=1 // pred_check_branch
      %280 = sbr.rel (0) target = $region49
    $region48: #{tpu_custom_call.1} parent=1 // pred_region
      %281 = dma.done [#allocation5], 32
    $region49: #{tpu_custom_call.1} parent=1 // pred_fallthru
      _
    %282 = vsyncpa [#allocation4], 1
    %283 = vsyncpa [#allocation7], 1
    %284 = vsyncpa [#allocation5], 1

</llo_original>
